<compile_context>
chip_gen: v7x
topology: tpu7x:2x2x1
jax: 0.10.0
libtpu: 0.0.40
codegen_flags: <defaults>
</compile_context>

<pallas_src>
import jax
import jax.numpy as jnp
from jax.experimental import pallas as pl
from jax.experimental.pallas import tpu as pltpu


def _identity_kernel(x_hbm_ref, o_hbm_ref, flag_ref):
    # x_hbm_ref and o_hbm_ref alias the same HBM buffer
    # (input_output_aliases={0: 0}), so the output already holds the input
    # bytes: nothing to DMA, nothing to compute.
    del x_hbm_ref, o_hbm_ref
    # Single SMEM scalar store keeps the kernel body non-empty; costs one
    # scalar store and touches no HBM.
    flag_ref[0] = jnp.int32(1)


def identity(x: jax.Array) -> jax.Array:
    """Identity mapping as a zero-copy Pallas TPU kernel (any shape / dtype)."""
    return pl.pallas_call(
        _identity_kernel,
        out_shape=jax.ShapeDtypeStruct(x.shape, x.dtype),
        # Leave both operands wherever XLA placed them (HBM); ANY-space
        # operands get no auto-generated HBM<->VMEM tiles.
        in_specs=[pl.BlockSpec(memory_space=pl.ANY)],
        out_specs=pl.BlockSpec(memory_space=pl.ANY),
        # Output 0 reuses input 0's buffer: zero bytes moved by the kernel.
        input_output_aliases={0: 0},
        scratch_shapes=[pltpu.SMEM((1,), jnp.int32)],
    )(x)


if __name__ == "__main__":
    key = jax.random.PRNGKey(0)
    # Small NCHW activation: batch=2, channels=4, spatial=16x16.
    x = jax.random.normal(key, (2, 4, 16, 16), dtype=jnp.float32)
    x_host = jax.device_get(x)  # snapshot for a donation-proof comparison

    y = identity(x)
    jax.block_until_ready(y)

    assert y.shape == x.shape and y.dtype == x.dtype
    assert (jax.device_get(y) == x_host).all()
    print("KERNEL_OK")
</pallas_src>

<mosaic_0001>
module attributes {stable_mosaic.version = 11 : i64} {
  func.func @_identity_kernel(%arg0: memref<2x4x16x16xf32, #tpu.memory_space<any>>, %arg1: memref<2x4x16x16xf32, #tpu.memory_space<any>>, %arg2: memref<1xi32, #tpu.memory_space<smem>>) attributes {dimension_semantics = [], scalar_prefetch = 0 : i64, scratch_operands = 1 : i64, tpu.core_type = #tpu.core_type<tc>} {
    %c1_i32 = arith.constant 1 : i32
    %c0 = arith.constant 0 : index
    %0 = memref.load %arg2[%c0] : memref<1xi32, #tpu.memory_space<smem>>
    memref.store %c1_i32, %arg2[%c0] : memref<1xi32, #tpu.memory_space<smem>>
    return
  }
}

</mosaic_0001>

<llo_original>
// kernel: tpu_custom_call.1
$region0: #{tpu_custom_call.1}
  #allocation0 [shape = 'u32[]', space=smem, size = 0x4, offset = 0x4, fixed_abs, tag = 'smem constant byte address 0x4 - core index']
  #allocation1 [shape = 'u32[144,128]{1,0:T(1,128)}', space=vmem, size = 0x12000, scoped, tag = 'internal scratch']
  #allocation2 [shape = 's32[1]{0:T(128)}', space=smem, size = 0x200, scoped, tag = 'scratch operand']
  %s0 = inlined_call_operand.hbm [shape: f32[2,4,16,16], index: 0, kind: input, shape index: {}, may-alias: {0,1}]
  %s1 = inlined_call_operand.hbm [shape: f32[2,4,16,16], index: 1, kind: output, shape index: {}, may-alias: {0,1}]
  %s2 = sld [smem:[#allocation0]]
  $region2: #{tpu_custom_call.1} parent=0
    _
  %s4 = ssub.s32 1, %s2
  %s5 = scalar_select 0, %s4, %s2
  %s6 = scalar_lea.smem [#allocation2], 0
  %7 = sst [smem:[%s6]] 1

</llo_original>
